<compile_context>
chip_gen: v6e
topology: v6e:2x2x1
jax: 0.10.0
libtpu: 0.0.40
codegen_flags: <defaults>
</compile_context>

<pallas_src>
import jax
import jax.numpy as jnp
import numpy as np
from jax import lax
from jax.experimental import pallas as pl
from jax.experimental.pallas import tpu as pltpu


_LANES = 128                # TPU lane width / channel padding target
_POS = 16                   # 4x4 spatial positions


def _round_up(x, m):
    return ((x + m - 1) // m) * m


def _batch_tiling(batch, width_p):
    """Rows per grid step = 16 * TB.

    * TB is a multiple of 8 (sublane-aligned per-position slices).
    * For batch > 16 we force >= 2 grid steps so v7x's two TensorCores both get
      work under dimension_semantics=("parallel",).
    * TB is capped so a double-buffered bf16 input tile stays ~<= 4 MiB and the
      row count stays in the measured >=512-row sweet spot without ballooning.
    """
    bytes_per_sample = _POS * width_p * 2            # bf16 rows per sample
    tb_cap = max(8, min(256, ((4 << 20) // max(bytes_per_sample, 1)) // 8 * 8))
    if batch > 16:
        tb = _round_up(-(-batch // 2), 8)            # >= 2 tiles
    else:
        tb = _round_up(max(batch, 1), 8)
    tb = min(tb, tb_cap)
    b_pad = _round_up(batch, tb)
    return tb, b_pad


def _compiler_params(vmem_need_bytes):
    # Explicit VMEM budget with 2x headroom, clamped to 8..32 MiB: never request
    # the whole 64 MiB of a v7x TC (leaves no room for Mosaic internal scratch).
    limit = int(min(32 << 20, max(8 << 20, 2 * int(vmem_need_bytes))))
    return pltpu.CompilerParams(
        dimension_semantics=("parallel",),            # shard batch tiles across TCs
        vmem_limit_bytes=limit,
    )


# ---------------------------------------------------------------------------
# Pallas kernels
# ---------------------------------------------------------------------------

def _joint_logits_kernel(x_ref, w_ref, bias_ref, wout_ref, bout_ref, o_ref, acc_ref):
    """Fused Conv3x3(pad=1, no bias) + BN(eval, folded) + LeakyReLU(0.2)
    + Conv2d(k=4, s=4, bias) + Sigmoid for one tile of TB samples.

    Rows are position-major / sample-minor: row = p*TB + b, p = y*4 + x.
      x_ref    : (1, 16*TB, K_p)  bf16  im2col'd activations (zeros for padding)
      w_ref    : (K_p, Cout_p)    bf16  3x3 weights, BN scale folded, K-packed
      bias_ref : (1, Cout_p)      f32   folded BN bias
      wout_ref : (16, Cout_p)     f32   logits-conv weight per position
      bout_ref : (1, 1)           f32   logits-conv bias
      o_ref    : (TB, 128)        f32   sigmoid(logit) broadcast across lanes
      acc_ref  : (16*TB, Cout_p)  f32   post-activation scratch (VMEM)
    """
    tb = o_ref.shape[0]

    # Single packed-K matmul (fills the 256-deep MXU on v6e/v7x in one issue;
    # no tap masks, no zero-init, no accumulator RMW).
    h = jnp.dot(x_ref[0], w_ref[...], preferred_element_type=jnp.float32)
    h = h + bias_ref[...]                                  # folded BN bias
    acc_ref[...] = jnp.where(h >= 0.0, h, 0.2 * h)         # LeakyReLU, one pass

    # Logits head: Conv2d(k=4, s=4) == per-position weighted lane reduction.
    z = None
    for p in range(_POS):
        zp = jnp.sum(acc_ref[p * tb:(p + 1) * tb, :] * wout_ref[p:p + 1, :],
                     axis=1, keepdims=True)
        z = zp if z is None else z + zp
    z = z + bout_ref[...]
    sig = pl.reciprocal(1.0 + jnp.exp(-z), approx=True)    # sigmoid on EUP
    o_ref[...] = jnp.broadcast_to(sig, o_ref.shape)        # lane-dense store


def _logits_kernel(x_ref, wout_ref, bout_ref, o_ref):
    """Unconditional head: Conv2d(k=4, s=4, bias) + Sigmoid for TB samples.

      x_ref    : (1, 16*TB, C_p) bf16  (widened to f32 in-kernel)
      wout_ref : (16, C_p)       f32
      bout_ref : (1, 1)          f32
      o_ref    : (TB, 128)       f32
    """
    tb = o_ref.shape[0]
    z = None
    for p in range(_POS):
        hp = x_ref[0, p * tb:(p + 1) * tb, :].astype(jnp.float32)
        zp = jnp.sum(hp * wout_ref[p:p + 1, :], axis=1, keepdims=True)
        z = zp if z is None else z + zp
    z = z + bout_ref[...]
    sig = pl.reciprocal(1.0 + jnp.exp(-z), approx=True)
    o_ref[...] = jnp.broadcast_to(sig, o_ref.shape)


# ---------------------------------------------------------------------------
# JAX-side packing glue (pure layout plumbing, no compute hoisted)
# ---------------------------------------------------------------------------

def _pack_rows(x_bpc, tb, b_pad, c_p, dtype):
    """(B, 16, C) -> (num_tiles, 16*TB, C_p), rows position-major / sample-minor."""
    b, p, c = x_bpc.shape
    x = x_bpc.astype(dtype)
    x = jnp.pad(x, ((0, b_pad - b), (0, 0), (0, c_p - c)))
    x = x.reshape(b_pad // tb, tb, p, c_p)
    x = jnp.transpose(x, (0, 2, 1, 3)).reshape(b_pad // tb, p * tb, c_p)
    return x


@jax.jit
def _cond_forward(w_packed, bias_bn, wout, bout, h_code, c_code):
    batch, c8 = h_code.shape[0], h_code.shape[1]
    nef = c_code.shape[1]
    k_p, cout_p = w_packed.shape
    cin = c8 + nef
    tb, b_pad = _batch_tiling(batch, k_p)
    num_tiles = b_pad // tb
    rows = _POS * tb

    # NCHW -> NHWC, concat broadcast c_code, then 3x3/pad-1 im2col with zeros
    # baked into the out-of-bounds taps (so the kernel needs no masks).
    h = jnp.transpose(h_code, (0, 2, 3, 1))                          # (B,4,4,C8)
    c = jnp.broadcast_to(c_code[:, None, None, :], (batch, 4, 4, nef))
    hc = jnp.concatenate([h, c], axis=3)                             # (B,4,4,Cin)
    hc_pad = jnp.pad(hc, ((0, 0), (1, 1), (1, 1), (0, 0)))
    patches = [hc_pad[:, dy:dy + 4, dx:dx + 4, :]
               for dy in range(3) for dx in range(3)]                # tap order ky*3+kx
    x = jnp.concatenate(patches, axis=-1).reshape(batch, _POS, 9 * cin)
    x = _pack_rows(x, tb, b_pad, k_p, jnp.bfloat16)

    vmem_need = (2 * rows * k_p * 2                 # double-buffered bf16 input
                 + 2 * tb * _LANES * 4              # double-buffered f32 output
                 + rows * cout_p * 4                # f32 scratch
                 + (k_p * 2 + (_POS + 2) * 4) * cout_p)  # resident weights/bias

    out = pl.pallas_call(
        _joint_logits_kernel,
        out_shape=jax.ShapeDtypeStruct((b_pad, _LANES), jnp.float32),
        grid=(num_tiles,),
        in_specs=[
            pl.BlockSpec((1, rows, k_p), lambda i: (i, 0, 0)),      # streamed tile
            pl.BlockSpec((k_p, cout_p), lambda i: (0, 0)),          # packed weight
            pl.BlockSpec((1, cout_p), lambda i: (0, 0)),            # BN bias
            pl.BlockSpec((_POS, cout_p), lambda i: (0, 0)),         # logits weight
            pl.BlockSpec((1, 1), lambda i: (0, 0)),                 # logits bias
        ],
        out_specs=pl.BlockSpec((tb, _LANES), lambda i: (i, 0)),
        scratch_shapes=[pltpu.VMEM((rows, cout_p), jnp.float32)],
        compiler_params=_compiler_params(vmem_need),
    )(x, w_packed, bias_bn, wout, bout)
    return out[:batch, 0]


@jax.jit
def _uncond_forward(wout, bout, h_code):
    batch, c8 = h_code.shape[0], h_code.shape[1]
    c_p = wout.shape[1]
    tb, b_pad = _batch_tiling(batch, c_p)
    num_tiles = b_pad // tb
    rows = _POS * tb

    h = jnp.transpose(h_code, (0, 2, 3, 1)).reshape(batch, _POS, c8)
    x = _pack_rows(h, tb, b_pad, c_p, jnp.bfloat16)     # bf16 halves HBM->VMEM DMA

    vmem_need = (2 * rows * c_p * 2 + 2 * tb * _LANES * 4 + (_POS + 2) * c_p * 4)

    out = pl.pallas_call(
        _logits_kernel,
        out_shape=jax.ShapeDtypeStruct((b_pad, _LANES), jnp.float32),
        grid=(num_tiles,),
        in_specs=[
            pl.BlockSpec((1, rows, c_p), lambda i: (i, 0, 0)),
            pl.BlockSpec((_POS, c_p), lambda i: (0, 0)),
            pl.BlockSpec((1, 1), lambda i: (0, 0)),
        ],
        out_specs=pl.BlockSpec((tb, _LANES), lambda i: (i, 0)),
        compiler_params=_compiler_params(vmem_need),
    )(x, wout, bout)
    return out[:batch, 0]


# ---------------------------------------------------------------------------
# module wrapper
# ---------------------------------------------------------------------------

class DiscriminatorGetLogitsPallas:
    def __init__(self, ndf, nef, b_condition=False, key=None):
        if key is None:
            key = jax.random.PRNGKey(0)
        self.df_dim = ndf
        self.ef_dim = nef
        self.b_condition = b_condition
        k = jax.random.split(key, 7)
        c_out = ndf * 8
        cout_p = _round_up(c_out, _LANES)

        if b_condition:
            c_in = c_out + nef
            k_real = 9 * c_in
            k_p = _round_up(k_real, _LANES)
            # Conv3x3 weight (Cout, Cin, 3, 3), no bias.
            self.w_joint = 0.05 * jax.random.normal(k[0], (c_out, c_in, 3, 3), jnp.float32)
            # BatchNorm2d params / running stats (deterministic, eval-mode).
            self.bn_gamma = 1.0 + 0.1 * jax.random.normal(k[1], (c_out,), jnp.float32)
            self.bn_beta = 0.1 * jax.random.normal(k[2], (c_out,), jnp.float32)
            self.bn_mean = 0.1 * jax.random.normal(k[3], (c_out,), jnp.float32)
            self.bn_var = jnp.abs(jax.random.normal(k[4], (c_out,), jnp.float32)) + 0.5
            # Fold BN scale into the conv weight; pack as (K_p, Cout_p) bf16 with
            # the contraction dim ordered (ky, kx, cin) to match the im2col.
            eps = 1e-5
            scale = self.bn_gamma / jnp.sqrt(self.bn_var + eps)
            wf = self.w_joint * scale[:, None, None, None]
            w_pack = jnp.transpose(wf, (2, 3, 1, 0)).reshape(k_real, c_out)
            self._w_packed = jnp.pad(
                w_pack, ((0, k_p - k_real), (0, cout_p - c_out))
            ).astype(jnp.bfloat16)
            bias = self.bn_beta - self.bn_mean * scale
            self._bias = jnp.pad(bias, (0, cout_p - c_out)).reshape(1, cout_p).astype(jnp.float32)

        # output_logits Conv2d(ndf*8 -> 1, kernel=4, stride=4) with bias.
        self.w_out = 0.05 * jax.random.normal(k[5], (1, c_out, 4, 4), jnp.float32)
        self.b_out = 0.1 * jax.random.normal(k[6], (1,), jnp.float32)
        wout = jnp.transpose(self.w_out[0], (1, 2, 0)).reshape(_POS, c_out)   # (p, C)
        self._wout = jnp.pad(wout, ((0, 0), (0, cout_p - c_out))).astype(jnp.float32)
        self._bout = self.b_out.reshape(1, 1).astype(jnp.float32)

    def __call__(self, h_code, c_code=None):
        if self.b_condition and c_code is not None:
            return _cond_forward(self._w_packed, self._bias, self._wout, self._bout,
                                 h_code, c_code)
        return _uncond_forward(self._wout, self._bout, h_code)


# ---------------- pure-JAX f32 reference (for correctness check) ----------------

def reference_forward(model, h_code, c_code=None):
    if model.b_condition and c_code is not None:
        c = jnp.broadcast_to(c_code.reshape(-1, model.ef_dim, 1, 1),
                             (h_code.shape[0], model.ef_dim, 4, 4))
        hc = jnp.concatenate([h_code, c], axis=1)
        y = lax.conv_general_dilated(hc, model.w_joint, (1, 1), ((1, 1), (1, 1)),
                                     dimension_numbers=('NCHW', 'OIHW', 'NCHW'))
        eps = 1e-5
        y = (y - model.bn_mean[None, :, None, None]) / jnp.sqrt(
            model.bn_var[None, :, None, None] + eps)
        y = y * model.bn_gamma[None, :, None, None] + model.bn_beta[None, :, None, None]
        hc = jnp.where(y >= 0.0, y, 0.2 * y)
    else:
        hc = h_code
    z = lax.conv_general_dilated(hc, model.w_out, (4, 4), ((0, 0), (0, 0)),
                                 dimension_numbers=('NCHW', 'OIHW', 'NCHW'))
    z = z + model.b_out[None, :, None, None]
    return jax.nn.sigmoid(z).reshape(-1)


if __name__ == "__main__":
    key = jax.random.PRNGKey(0)
    ndf, nef = 4, 8                                 # ndf*8 = 32 channels, 4x4 spatial
    kh, kc, kp, kh2, kc2 = jax.random.split(key, 5)

    model_c = DiscriminatorGetLogitsPallas(ndf, nef, b_condition=True, key=kp)
    model_u = DiscriminatorGetLogitsPallas(ndf, nef, b_condition=False, key=kp)

    # Conditional path (fused jointConv + logits head), batch=2.
    B = 2
    h_code = jax.random.normal(kh, (B, ndf * 8, 4, 4), jnp.float32)
    c_code = jax.random.normal(kc, (B, nef), jnp.float32)
    out_c = jax.block_until_ready(model_c(h_code, c_code))
    ref_c = reference_forward(model_c, h_code, c_code)
    np.testing.assert_allclose(np.asarray(out_c), np.asarray(ref_c), rtol=2e-2, atol=2e-2)
    assert out_c.shape == (B,)

    # Unconditional path (logits head only).
    out_u = jax.block_until_ready(model_u(h_code))
    ref_u = reference_forward(model_u, h_code)
    np.testing.assert_allclose(np.asarray(out_u), np.asarray(ref_u), rtol=2e-2, atol=2e-2)
    assert out_u.shape == (B,)

    # Larger batch: exercises the 2-tile grid (v7x dual-TC split) + batch padding.
    B2 = 80
    h2 = jax.random.normal(kh2, (B2, ndf * 8, 4, 4), jnp.float32)
    c2 = jax.random.normal(kc2, (B2, nef), jnp.float32)
    out2 = jax.block_until_ready(model_c(h2, c2))
    ref2 = reference_forward(model_c, h2, c2)
    np.testing.assert_allclose(np.asarray(out2), np.asarray(ref2), rtol=2e-2, atol=2e-2)
    assert out2.shape == (B2,)

    print("KERNEL_OK")
</pallas_src>

<mosaic_0001>
module attributes {stable_mosaic.version = 11 : i64} {
  func.func @_joint_logits_kernel(%arg0: i32, %arg1: memref<1x128x384xbf16, #tpu.memory_space<vmem>>, %arg2: memref<384x128xbf16, #tpu.memory_space<vmem>>, %arg3: memref<1x128xf32, #tpu.memory_space<vmem>>, %arg4: memref<16x128xf32, #tpu.memory_space<vmem>>, %arg5: memref<1x1xf32, #tpu.memory_space<vmem>>, %arg6: memref<8x128xf32, #tpu.memory_space<vmem>>, %arg7: memref<128x128xf32, #tpu.memory_space<vmem>>) attributes {dimension_semantics = [#tpu.dimension_semantics<parallel>], iteration_bounds = array<i64: 1>, scalar_prefetch = 0 : i64, scratch_operands = 1 : i64, tpu.core_type = #tpu.core_type<tc>, window_params = [{transform_indices = @transform_0, window_bounds = array<i64: 1, 128, 384>}, {pipeline_mode = #tpu.pipeline_mode<synchronous>, transform_indices = @transform_1, window_bounds = array<i64: 384, 128>}, {pipeline_mode = #tpu.pipeline_mode<synchronous>, transform_indices = @transform_2, window_bounds = array<i64: 1, 128>}, {pipeline_mode = #tpu.pipeline_mode<synchronous>, transform_indices = @transform_3, window_bounds = array<i64: 16, 128>}, {pipeline_mode = #tpu.pipeline_mode<synchronous>, transform_indices = @transform_4, window_bounds = array<i64: 1, 1>}, {transform_indices = @transform_5, window_bounds = array<i64: 8, 128>}]} {
    %c0 = arith.constant 0 : index
    %c0_0 = arith.constant 0 : index
    %c0_1 = arith.constant 0 : index
    %0 = vector.load %arg1[%c0, %c0_0, %c0_1] : memref<1x128x384xbf16, #tpu.memory_space<vmem>>, vector<1x128x384xbf16>
    %1 = vector.shape_cast %0 : vector<1x128x384xbf16> to vector<128x384xbf16>
    %c0_2 = arith.constant 0 : index
    %c0_3 = arith.constant 0 : index
    %2 = vector.load %arg2[%c0_2, %c0_3] : memref<384x128xbf16, #tpu.memory_space<vmem>>, vector<384x128xbf16>
    %cst = arith.constant dense<0.000000e+00> : vector<128x128xf32>
    %3 = tpu.matmul %1, %2, %cst {dimension_numbers = #tpu.dot_dimension_numbers<[1], [0], [0], [1], [0, 0, 1, 1], [], []>} : vector<128x384xbf16>, vector<384x128xbf16>, vector<128x128xf32> -> vector<128x128xf32>
    %c0_4 = arith.constant 0 : index
    %c0_5 = arith.constant 0 : index
    %4 = vector.load %arg3[%c0_4, %c0_5] : memref<1x128xf32, #tpu.memory_space<vmem>>, vector<1x128xf32>
    %5 = vector.broadcast %4 : vector<1x128xf32> to vector<128x128xf32>
    %6 = arith.addf %3, %5 : vector<128x128xf32>
    %cst_6 = arith.constant 0.000000e+00 : f32
    %7 = vector.broadcast %cst_6 : f32 to vector<128x128xf32>
    %8 = arith.cmpf oge, %6, %7 : vector<128x128xf32>
    %cst_7 = arith.constant 2.000000e-01 : f32
    %9 = vector.broadcast %cst_7 : f32 to vector<128x128xf32>
    %10 = arith.mulf %9, %6 : vector<128x128xf32>
    %11 = arith.select %8, %6, %10 : vector<128x128xi1>, vector<128x128xf32>
    %c0_8 = arith.constant 0 : index
    %c0_9 = arith.constant 0 : index
    %12 = vector.load %arg7[%c0_8, %c0_9] : memref<128x128xf32, #tpu.memory_space<vmem>>, vector<128x128xf32>
    tpu.vector_store %arg7[%c0_8, %c0_9], %11 {strides = array<i32>} : memref<128x128xf32, #tpu.memory_space<vmem>>, vector<128x128xf32>,
    %c0_10 = arith.constant 0 : index
    %c0_11 = arith.constant 0 : index
    %13 = vector.load %arg7[%c0_10, %c0_11] : memref<128x128xf32, #tpu.memory_space<vmem>>, vector<8x128xf32>
    %c0_12 = arith.constant 0 : index
    %c0_13 = arith.constant 0 : index
    %14 = vector.load %arg4[%c0_12, %c0_13] : memref<16x128xf32, #tpu.memory_space<vmem>>, vector<1x128xf32>
    %15 = vector.broadcast %14 : vector<1x128xf32> to vector<8x128xf32>
    %16 = arith.mulf %13, %15 : vector<8x128xf32>
    %cst_14 = arith.constant dense<0.000000e+00> : vector<8xf32>
    %17 = vector.multi_reduction <add>, %16, %cst_14 [1] : vector<8x128xf32> to vector<8xf32>
    %18 = vector.shape_cast %17 : vector<8xf32> to vector<8x1xf32>
    %c8 = arith.constant 8 : index
    %c0_15 = arith.constant 0 : index
    %19 = vector.load %arg7[%c8, %c0_15] : memref<128x128xf32, #tpu.memory_space<vmem>>, vector<8x128xf32>
    %c1 = arith.constant 1 : index
    %c0_16 = arith.constant 0 : index
    %20 = vector.load %arg4[%c1, %c0_16] : memref<16x128xf32, #tpu.memory_space<vmem>>, vector<1x128xf32>
    %21 = vector.broadcast %20 : vector<1x128xf32> to vector<8x128xf32>
    %22 = arith.mulf %19, %21 : vector<8x128xf32>
    %cst_17 = arith.constant dense<0.000000e+00> : vector<8xf32>
    %23 = vector.multi_reduction <add>, %22, %cst_17 [1] : vector<8x128xf32> to vector<8xf32>
    %24 = vector.shape_cast %23 : vector<8xf32> to vector<8x1xf32>
    %25 = arith.addf %18, %24 : vector<8x1xf32>
    %c16 = arith.constant 16 : index
    %c0_18 = arith.constant 0 : index
    %26 = vector.load %arg7[%c16, %c0_18] : memref<128x128xf32, #tpu.memory_space<vmem>>, vector<8x128xf32>
    %c2 = arith.constant 2 : index
    %c0_19 = arith.constant 0 : index
    %27 = vector.load %arg4[%c2, %c0_19] : memref<16x128xf32, #tpu.memory_space<vmem>>, vector<1x128xf32>
    %28 = vector.broadcast %27 : vector<1x128xf32> to vector<8x128xf32>
    %29 = arith.mulf %26, %28 : vector<8x128xf32>
    %cst_20 = arith.constant dense<0.000000e+00> : vector<8xf32>
    %30 = vector.multi_reduction <add>, %29, %cst_20 [1] : vector<8x128xf32> to vector<8xf32>
    %31 = vector.shape_cast %30 : vector<8xf32> to vector<8x1xf32>
    %32 = arith.addf %25, %31 : vector<8x1xf32>
    %c24 = arith.constant 24 : index
    %c0_21 = arith.constant 0 : index
    %33 = vector.load %arg7[%c24, %c0_21] : memref<128x128xf32, #tpu.memory_space<vmem>>, vector<8x128xf32>
    %c3 = arith.constant 3 : index
    %c0_22 = arith.constant 0 : index
    %34 = vector.load %arg4[%c3, %c0_22] : memref<16x128xf32, #tpu.memory_space<vmem>>, vector<1x128xf32>
    %35 = vector.broadcast %34 : vector<1x128xf32> to vector<8x128xf32>
    %36 = arith.mulf %33, %35 : vector<8x128xf32>
    %cst_23 = arith.constant dense<0.000000e+00> : vector<8xf32>
    %37 = vector.multi_reduction <add>, %36, %cst_23 [1] : vector<8x128xf32> to vector<8xf32>
    %38 = vector.shape_cast %37 : vector<8xf32> to vector<8x1xf32>
    %39 = arith.addf %32, %38 : vector<8x1xf32>
    %c32 = arith.constant 32 : index
    %c0_24 = arith.constant 0 : index
    %40 = vector.load %arg7[%c32, %c0_24] : memref<128x128xf32, #tpu.memory_space<vmem>>, vector<8x128xf32>
    %c4 = arith.constant 4 : index
    %c0_25 = arith.constant 0 : index
    %41 = vector.load %arg4[%c4, %c0_25] : memref<16x128xf32, #tpu.memory_space<vmem>>, vector<1x128xf32>
    %42 = vector.broadcast %41 : vector<1x128xf32> to vector<8x128xf32>
    %43 = arith.mulf %40, %42 : vector<8x128xf32>
    %cst_26 = arith.constant dense<0.000000e+00> : vector<8xf32>
    %44 = vector.multi_reduction <add>, %43, %cst_26 [1] : vector<8x128xf32> to vector<8xf32>
    %45 = vector.shape_cast %44 : vector<8xf32> to vector<8x1xf32>
    %46 = arith.addf %39, %45 : vector<8x1xf32>
    %c40 = arith.constant 40 : index
    %c0_27 = arith.constant 0 : index
    %47 = vector.load %arg7[%c40, %c0_27] : memref<128x128xf32, #tpu.memory_space<vmem>>, vector<8x128xf32>
    %c5 = arith.constant 5 : index
    %c0_28 = arith.constant 0 : index
    %48 = vector.load %arg4[%c5, %c0_28] : memref<16x128xf32, #tpu.memory_space<vmem>>, vector<1x128xf32>
    %49 = vector.broadcast %48 : vector<1x128xf32> to vector<8x128xf32>
    %50 = arith.mulf %47, %49 : vector<8x128xf32>
    %cst_29 = arith.constant dense<0.000000e+00> : vector<8xf32>
    %51 = vector.multi_reduction <add>, %50, %cst_29 [1] : vector<8x128xf32> to vector<8xf32>
    %52 = vector.shape_cast %51 : vector<8xf32> to vector<8x1xf32>
    %53 = arith.addf %46, %52 : vector<8x1xf32>
    %c48 = arith.constant 48 : index
    %c0_30 = arith.constant 0 : index
    %54 = vector.load %arg7[%c48, %c0_30] : memref<128x128xf32, #tpu.memory_space<vmem>>, vector<8x128xf32>
    %c6 = arith.constant 6 : index
    %c0_31 = arith.constant 0 : index
    %55 = vector.load %arg4[%c6, %c0_31] : memref<16x128xf32, #tpu.memory_space<vmem>>, vector<1x128xf32>
    %56 = vector.broadcast %55 : vector<1x128xf32> to vector<8x128xf32>
    %57 = arith.mulf %54, %56 : vector<8x128xf32>
    %cst_32 = arith.constant dense<0.000000e+00> : vector<8xf32>
    %58 = vector.multi_reduction <add>, %57, %cst_32 [1] : vector<8x128xf32> to vector<8xf32>
    %59 = vector.shape_cast %58 : vector<8xf32> to vector<8x1xf32>
    %60 = arith.addf %53, %59 : vector<8x1xf32>
    %c56 = arith.constant 56 : index
    %c0_33 = arith.constant 0 : index
    %61 = vector.load %arg7[%c56, %c0_33] : memref<128x128xf32, #tpu.memory_space<vmem>>, vector<8x128xf32>
    %c7 = arith.constant 7 : index
    %c0_34 = arith.constant 0 : index
    %62 = vector.load %arg4[%c7, %c0_34] : memref<16x128xf32, #tpu.memory_space<vmem>>, vector<1x128xf32>
    %63 = vector.broadcast %62 : vector<1x128xf32> to vector<8x128xf32>
    %64 = arith.mulf %61, %63 : vector<8x128xf32>
    %cst_35 = arith.constant dense<0.000000e+00> : vector<8xf32>
    %65 = vector.multi_reduction <add>, %64, %cst_35 [1] : vector<8x128xf32> to vector<8xf32>
    %66 = vector.shape_cast %65 : vector<8xf32> to vector<8x1xf32>
    %67 = arith.addf %60, %66 : vector<8x1xf32>
    %c64 = arith.constant 64 : index
    %c0_36 = arith.constant 0 : index
    %68 = vector.load %arg7[%c64, %c0_36] : memref<128x128xf32, #tpu.memory_space<vmem>>, vector<8x128xf32>
    %c8_37 = arith.constant 8 : index
    %c0_38 = arith.constant 0 : index
    %69 = vector.load %arg4[%c8_37, %c0_38] : memref<16x128xf32, #tpu.memory_space<vmem>>, vector<1x128xf32>
    %70 = vector.broadcast %69 : vector<1x128xf32> to vector<8x128xf32>
    %71 = arith.mulf %68, %70 : vector<8x128xf32>
    %cst_39 = arith.constant dense<0.000000e+00> : vector<8xf32>
    %72 = vector.multi_reduction <add>, %71, %cst_39 [1] : vector<8x128xf32> to vector<8xf32>
    %73 = vector.shape_cast %72 : vector<8xf32> to vector<8x1xf32>
    %74 = arith.addf %67, %73 : vector<8x1xf32>
    %c72 = arith.constant 72 : index
    %c0_40 = arith.constant 0 : index
    %75 = vector.load %arg7[%c72, %c0_40] : memref<128x128xf32, #tpu.memory_space<vmem>>, vector<8x128xf32>
    %c9 = arith.constant 9 : index
    %c0_41 = arith.constant 0 : index
    %76 = vector.load %arg4[%c9, %c0_41] : memref<16x128xf32, #tpu.memory_space<vmem>>, vector<1x128xf32>
    %77 = vector.broadcast %76 : vector<1x128xf32> to vector<8x128xf32>
    %78 = arith.mulf %75, %77 : vector<8x128xf32>
    %cst_42 = arith.constant dense<0.000000e+00> : vector<8xf32>
    %79 = vector.multi_reduction <add>, %78, %cst_42 [1] : vector<8x128xf32> to vector<8xf32>
    %80 = vector.shape_cast %79 : vector<8xf32> to vector<8x1xf32>
    %81 = arith.addf %74, %80 : vector<8x1xf32>
    %c80 = arith.constant 80 : index
    %c0_43 = arith.constant 0 : index
    %82 = vector.load %arg7[%c80, %c0_43] : memref<128x128xf32, #tpu.memory_space<vmem>>, vector<8x128xf32>
    %c10 = arith.constant 10 : index
    %c0_44 = arith.constant 0 : index
    %83 = vector.load %arg4[%c10, %c0_44] : memref<16x128xf32, #tpu.memory_space<vmem>>, vector<1x128xf32>
    %84 = vector.broadcast %83 : vector<1x128xf32> to vector<8x128xf32>
    %85 = arith.mulf %82, %84 : vector<8x128xf32>
    %cst_45 = arith.constant dense<0.000000e+00> : vector<8xf32>
    %86 = vector.multi_reduction <add>, %85, %cst_45 [1] : vector<8x128xf32> to vector<8xf32>
    %87 = vector.shape_cast %86 : vector<8xf32> to vector<8x1xf32>
    %88 = arith.addf %81, %87 : vector<8x1xf32>
    %c88 = arith.constant 88 : index
    %c0_46 = arith.constant 0 : index
    %89 = vector.load %arg7[%c88, %c0_46] : memref<128x128xf32, #tpu.memory_space<vmem>>, vector<8x128xf32>
    %c11 = arith.constant 11 : index
    %c0_47 = arith.constant 0 : index
    %90 = vector.load %arg4[%c11, %c0_47] : memref<16x128xf32, #tpu.memory_space<vmem>>, vector<1x128xf32>
    %91 = vector.broadcast %90 : vector<1x128xf32> to vector<8x128xf32>
    %92 = arith.mulf %89, %91 : vector<8x128xf32>
    %cst_48 = arith.constant dense<0.000000e+00> : vector<8xf32>
    %93 = vector.multi_reduction <add>, %92, %cst_48 [1] : vector<8x128xf32> to vector<8xf32>
    %94 = vector.shape_cast %93 : vector<8xf32> to vector<8x1xf32>
    %95 = arith.addf %88, %94 : vector<8x1xf32>
    %c96 = arith.constant 96 : index
    %c0_49 = arith.constant 0 : index
    %96 = vector.load %arg7[%c96, %c0_49] : memref<128x128xf32, #tpu.memory_space<vmem>>, vector<8x128xf32>
    %c12 = arith.constant 12 : index
    %c0_50 = arith.constant 0 : index
    %97 = vector.load %arg4[%c12, %c0_50] : memref<16x128xf32, #tpu.memory_space<vmem>>, vector<1x128xf32>
    %98 = vector.broadcast %97 : vector<1x128xf32> to vector<8x128xf32>
    %99 = arith.mulf %96, %98 : vector<8x128xf32>
    %cst_51 = arith.constant dense<0.000000e+00> : vector<8xf32>
    %100 = vector.multi_reduction <add>, %99, %cst_51 [1] : vector<8x128xf32> to vector<8xf32>
    %101 = vector.shape_cast %100 : vector<8xf32> to vector<8x1xf32>
    %102 = arith.addf %95, %101 : vector<8x1xf32>
    %c104 = arith.constant 104 : index
    %c0_52 = arith.constant 0 : index
    %103 = vector.load %arg7[%c104, %c0_52] : memref<128x128xf32, #tpu.memory_space<vmem>>, vector<8x128xf32>
    %c13 = arith.constant 13 : index
    %c0_53 = arith.constant 0 : index
    %104 = vector.load %arg4[%c13, %c0_53] : memref<16x128xf32, #tpu.memory_space<vmem>>, vector<1x128xf32>
    %105 = vector.broadcast %104 : vector<1x128xf32> to vector<8x128xf32>
    %106 = arith.mulf %103, %105 : vector<8x128xf32>
    %cst_54 = arith.constant dense<0.000000e+00> : vector<8xf32>
    %107 = vector.multi_reduction <add>, %106, %cst_54 [1] : vector<8x128xf32> to vector<8xf32>
    %108 = vector.shape_cast %107 : vector<8xf32> to vector<8x1xf32>
    %109 = arith.addf %102, %108 : vector<8x1xf32>
    %c112 = arith.constant 112 : index
    %c0_55 = arith.constant 0 : index
    %110 = vector.load %arg7[%c112, %c0_55] : memref<128x128xf32, #tpu.memory_space<vmem>>, vector<8x128xf32>
    %c14 = arith.constant 14 : index
    %c0_56 = arith.constant 0 : index
    %111 = vector.load %arg4[%c14, %c0_56] : memref<16x128xf32, #tpu.memory_space<vmem>>, vector<1x128xf32>
    %112 = vector.broadcast %111 : vector<1x128xf32> to vector<8x128xf32>
    %113 = arith.mulf %110, %112 : vector<8x128xf32>
    %cst_57 = arith.constant dense<0.000000e+00> : vector<8xf32>
    %114 = vector.multi_reduction <add>, %113, %cst_57 [1] : vector<8x128xf32> to vector<8xf32>
    %115 = vector.shape_cast %114 : vector<8xf32> to vector<8x1xf32>
    %116 = arith.addf %109, %115 : vector<8x1xf32>
    %c120 = arith.constant 120 : index
    %c0_58 = arith.constant 0 : index
    %117 = vector.load %arg7[%c120, %c0_58] : memref<128x128xf32, #tpu.memory_space<vmem>>, vector<8x128xf32>
    %c15 = arith.constant 15 : index
    %c0_59 = arith.constant 0 : index
    %118 = vector.load %arg4[%c15, %c0_59] : memref<16x128xf32, #tpu.memory_space<vmem>>, vector<1x128xf32>
    %119 = vector.broadcast %118 : vector<1x128xf32> to vector<8x128xf32>
    %120 = arith.mulf %117, %119 : vector<8x128xf32>
    %cst_60 = arith.constant dense<0.000000e+00> : vector<8xf32>
    %121 = vector.multi_reduction <add>, %120, %cst_60 [1] : vector<8x128xf32> to vector<8xf32>
    %122 = vector.shape_cast %121 : vector<8xf32> to vector<8x1xf32>
    %123 = arith.addf %116, %122 : vector<8x1xf32>
    %c0_61 = arith.constant 0 : index
    %c0_62 = arith.constant 0 : index
    %124 = vector.load %arg5[%c0_61, %c0_62] : memref<1x1xf32, #tpu.memory_space<vmem>>, vector<1x1xf32>
    %125 = vector.broadcast %124 : vector<1x1xf32> to vector<8x1xf32>
    %126 = arith.addf %123, %125 : vector<8x1xf32>
    %cst_63 = arith.constant 0.000000e+00 : f32
    %127 = vector.broadcast %cst_63 : f32 to vector<8x1xf32>
    %128 = arith.subf %127, %126 : vector<8x1xf32>
    %129 = math.exp %128 : vector<8x1xf32>
    %cst_64 = arith.constant 1.000000e+00 : f32
    %130 = vector.broadcast %cst_64 : f32 to vector<8x1xf32>
    %131 = arith.addf %130, %129 : vector<8x1xf32>
    %132 = tpu.reciprocal %131 {approx = true} : vector<8x1xf32> -> vector<8x1xf32>
    %133 = vector.shape_cast %132 : vector<8x1xf32> to vector<8x1xf32>
    %134 = vector.broadcast %133 : vector<8x1xf32> to vector<8x128xf32>
    %c0_65 = arith.constant 0 : index
    %c0_66 = arith.constant 0 : index
    %135 = vector.load %arg6[%c0_65, %c0_66] : memref<8x128xf32, #tpu.memory_space<vmem>>, vector<8x128xf32>
    tpu.vector_store %arg6[%c0_65, %c0_66], %134 {strides = array<i32>} : memref<8x128xf32, #tpu.memory_space<vmem>>, vector<8x128xf32>,
    return
  }
  func.func @transform_0(%arg0: i32) -> (i32, i32, i32) {
    %c0_i32 = arith.constant 0 : i32
    %c0_i32_0 = arith.constant 0 : i32
    %c0_i32_1 = arith.constant 0 : i32
    return %arg0, %c0_i32, %c0_i32_0 : i32, i32, i32
  }
  func.func @transform_1(%arg0: i32) -> (i32, i32) {
    %c0_i32 = arith.constant 0 : i32
    %c0_i32_0 = arith.constant 0 : i32
    %c0_i32_1 = arith.constant 0 : i32
    return %c0_i32, %c0_i32_0 : i32, i32
  }
  func.func @transform_2(%arg0: i32) -> (i32, i32) {
    %c0_i32 = arith.constant 0 : i32
    %c0_i32_0 = arith.constant 0 : i32
    %c0_i32_1 = arith.constant 0 : i32
    return %c0_i32, %c0_i32_0 : i32, i32
  }
  func.func @transform_3(%arg0: i32) -> (i32, i32) {
    %c0_i32 = arith.constant 0 : i32
    %c0_i32_0 = arith.constant 0 : i32
    %c0_i32_1 = arith.constant 0 : i32
    return %c0_i32, %c0_i32_0 : i32, i32
  }
  func.func @transform_4(%arg0: i32) -> (i32, i32) {
    %c0_i32 = arith.constant 0 : i32
    %c0_i32_0 = arith.constant 0 : i32
    %c0_i32_1 = arith.constant 0 : i32
    return %c0_i32, %c0_i32_0 : i32, i32
  }
  func.func @transform_5(%arg0: i32) -> (i32, i32) {
    %c0_i32 = arith.constant 0 : i32
    %c0_i32_0 = arith.constant 0 : i32
    return %arg0, %c0_i32 : i32, i32
  }
}

</mosaic_0001>

<llo_original>
// kernel: _cond_forward.1
$region0: #{_cond_forward.1}
  #allocation0 [shape = 'u32[]', space=smem, size = 0x4, offset = 0x4, fixed_abs, tag = 'smem constant byte address 0x4 - core index']
  #allocation1 [shape = 'u32[144,128]{1,0:T(1,128)}', space=vmem, size = 0x12000, scoped, tag = 'internal scratch']
  #allocation2 [shape = 'f32[128,128]{1,0:T(8,128)}', space=vmem, size = 0x10000, scoped, tag = 'scratch operand']
  #allocation3 [shape = 'f32[1,1]{1,0:T(1,128)S(1)}', space=vmem, size = 0x200, scoped, tag = 'scoped memory for _cond_forward.1']
  %s0 = inlined_call_operand.vmem [shape: bf16[1,128,384], index: 0, kind: input, shape index: {}]
  %s1 = inlined_call_operand.vmem [shape: bf16[384,128], index: 1, kind: input, shape index: {}]
  %s2 = inlined_call_operand.vmem [shape: f32[1,128], index: 2, kind: input, shape index: {}]
  %s3 = inlined_call_operand.vmem [shape: f32[16,128], index: 3, kind: input, shape index: {}]
  %s4 = inlined_call_operand.<no memory space> [shape: f32[1,1], index: 4, kind: input, shape index: {}]
  %s5 = inlined_call_operand.vmem [shape: f32[8,128], index: 5, kind: output, shape index: {}]
  %s6 = sld [smem:[#allocation0]]
  $region30: #{_cond_forward.1} parent=0
    _
  %s8 = ssub.s32 1, %s6
  %s9 = scalar_select 0, %s8, %s6
  %v10 = vstv %s4
  %11 = vst [vmem:[#allocation3] sm:$0x1] %v10
  // Predicated region
  $region2: #{_cond_forward.1} parent=0 // pred_check
    _
  $region3: #{_cond_forward.1} parent=0 // pred_check_branch
    %13 = sbr.rel (0) target = $region5
  $region4: #{_cond_forward.1} parent=0 // pred_region
    _
  $region5: #{_cond_forward.1} parent=0 // pred_fallthru
    _
  // Predicated region
  $region6: #{_cond_forward.1} parent=0 // pred_check
    _
  $region7: #{_cond_forward.1} parent=0 // pred_check_branch
    %15 = sbr.rel (0) target = $region9
  $region8: #{_cond_forward.1} parent=0 // pred_region
    _
  $region9: #{_cond_forward.1} parent=0 // pred_fallthru
    _
  // Predicated region
  $region10: #{_cond_forward.1} parent=0 // pred_check
    _
  $region11: #{_cond_forward.1} parent=0 // pred_check_branch
    %17 = sbr.rel (0) target = $region13
  $region12: #{_cond_forward.1} parent=0 // pred_region
    _
  $region13: #{_cond_forward.1} parent=0 // pred_fallthru
    _
  // Predicated region
  $region14: #{_cond_forward.1} parent=0 // pred_check
    _
  $region15: #{_cond_forward.1} parent=0 // pred_check_branch
    %19 = sbr.rel (0) target = $region17
  $region16: #{_cond_forward.1} parent=0 // pred_region
    _
  $region17: #{_cond_forward.1} parent=0 // pred_fallthru
    _
  // Predicated region
  $region18: #{_cond_forward.1} parent=0 // pred_check
    _
  $region19: #{_cond_forward.1} parent=0 // pred_check_branch
    %21 = sbr.rel (0) target = $region21
  $region20: #{_cond_forward.1} parent=0 // pred_region
    _
  $region21: #{_cond_forward.1} parent=0 // pred_fallthru
    _
  %v23 = vld [vmem:[%s0] sm:$0xff]
  %v24 = vld [vmem:[%s0 + $0x8] sm:$0xf]
  %v25 = vld [vmem:[%s0 + $0xc] sm:$0xff]
  %v26 = vld [vmem:[%s0 + $0x14] sm:$0xf]
  %v27 = vld [vmem:[%s0 + $0x18] sm:$0xff]
  %v28 = vld [vmem:[%s0 + $0x20] sm:$0xf]
  %v29 = vld [vmem:[%s0 + $0x24] sm:$0xff]
  %v30 = vld [vmem:[%s0 + $0x2c] sm:$0xf]
  %v31 = vld [vmem:[%s0 + $0x30] sm:$0xff]
  %v32 = vld [vmem:[%s0 + $0x38] sm:$0xf]
  %v33 = vld [vmem:[%s0 + $0x3c] sm:$0xff]
  %v34 = vld [vmem:[%s0 + $0x44] sm:$0xf]
  %v35 = vld [vmem:[%s0 + $0x48] sm:$0xff]
  %v36 = vld [vmem:[%s0 + $0x50] sm:$0xf]
  %v37 = vld [vmem:[%s0 + $0x54] sm:$0xff]
  %v38 = vld [vmem:[%s0 + $0x5c] sm:$0xf]
  %v39 = vld [vmem:[%s0 + $0x60] sm:$0xff]
  %v40 = vld [vmem:[%s0 + $0x68] sm:$0xf]
  %v41 = vld [vmem:[%s0 + $0x6c] sm:$0xff]
  %v42 = vld [vmem:[%s0 + $0x74] sm:$0xf]
  %v43 = vld [vmem:[%s0 + $0x78] sm:$0xff]
  %v44 = vld [vmem:[%s0 + $0x80] sm:$0xf]
  %v45 = vld [vmem:[%s0 + $0x84] sm:$0xff]
  %v46 = vld [vmem:[%s0 + $0x8c] sm:$0xf]
  %v47 = vld [vmem:[%s0 + $0x90] sm:$0xff]
  %v48 = vld [vmem:[%s0 + $0x98] sm:$0xf]
  %v49 = vld [vmem:[%s0 + $0x9c] sm:$0xff]
  %v50 = vld [vmem:[%s0 + $0xa4] sm:$0xf]
  %v51 = vld [vmem:[%s0 + $0xa8] sm:$0xff]
  %v52 = vld [vmem:[%s0 + $0xb0] sm:$0xf]
  %v53 = vld [vmem:[%s0 + $0xb4] sm:$0xff]
  %v54 = vld [vmem:[%s0 + $0xbc] sm:$0xf]
  %v55 = vld [vmem:[%s1] sm:$0xf]
  %v56 = vld [vmem:[%s1 + $0x4] sm:$0xf]
  %v57 = vld [vmem:[%s1 + $0x8] sm:$0xf]
  %v58 = vld [vmem:[%s1 + $0xc] sm:$0xf]
  %v59 = vld [vmem:[%s1 + $0x10] sm:$0xf]
  %v60 = vld [vmem:[%s1 + $0x14] sm:$0xf]
  %v61 = vld [vmem:[%s1 + $0x18] sm:$0xf]
  %v62 = vld [vmem:[%s1 + $0x1c] sm:$0xf]
  %v63 = vld [vmem:[%s1 + $0x20] sm:$0xf]
  %v64 = vld [vmem:[%s1 + $0x24] sm:$0xf]
  %v65 = vld [vmem:[%s1 + $0x28] sm:$0xf]
  %v66 = vld [vmem:[%s1 + $0x2c] sm:$0xf]
  %v67 = vld [vmem:[%s1 + $0x30] sm:$0xf]
  %v68 = vld [vmem:[%s1 + $0x34] sm:$0xf]
  %v69 = vld [vmem:[%s1 + $0x38] sm:$0xf]
  %v70 = vld [vmem:[%s1 + $0x3c] sm:$0xf]
  %v71 = vld [vmem:[%s1 + $0x40] sm:$0xf]
  %v72 = vld [vmem:[%s1 + $0x44] sm:$0xf]
  %v73 = vld [vmem:[%s1 + $0x48] sm:$0xf]
  %v74 = vld [vmem:[%s1 + $0x4c] sm:$0xf]
  %v75 = vld [vmem:[%s1 + $0x50] sm:$0xf]
  %v76 = vld [vmem:[%s1 + $0x54] sm:$0xf]
  %v77 = vld [vmem:[%s1 + $0x58] sm:$0xf]
  %v78 = vld [vmem:[%s1 + $0x5c] sm:$0xf]
  %v79 = vld [vmem:[%s1 + $0x60] sm:$0xf]
  %v80 = vld [vmem:[%s1 + $0x64] sm:$0xf]
  %v81 = vld [vmem:[%s1 + $0x68] sm:$0xf]
  %v82 = vld [vmem:[%s1 + $0x6c] sm:$0xf]
  %v83 = vld [vmem:[%s1 + $0x70] sm:$0xf]
  %v84 = vld [vmem:[%s1 + $0x74] sm:$0xf]
  %v85 = vld [vmem:[%s1 + $0x78] sm:$0xf]
  %v86 = vld [vmem:[%s1 + $0x7c] sm:$0xf]
  %v87 = vld [vmem:[%s1 + $0x80] sm:$0xf]
  %v88 = vld [vmem:[%s1 + $0x84] sm:$0xf]
  %v89 = vld [vmem:[%s1 + $0x88] sm:$0xf]
  %v90 = vld [vmem:[%s1 + $0x8c] sm:$0xf]
  %v91 = vld [vmem:[%s1 + $0x90] sm:$0xf]
  %v92 = vld [vmem:[%s1 + $0x94] sm:$0xf]
  %v93 = vld [vmem:[%s1 + $0x98] sm:$0xf]
  %v94 = vld [vmem:[%s1 + $0x9c] sm:$0xf]
  %v95 = vld [vmem:[%s1 + $0xa0] sm:$0xf]
  %v96 = vld [vmem:[%s1 + $0xa4] sm:$0xf]
  %v97 = vld [vmem:[%s1 + $0xa8] sm:$0xf]
  %v98 = vld [vmem:[%s1 + $0xac] sm:$0xf]
  %v99 = vld [vmem:[%s1 + $0xb0] sm:$0xf]
  %v100 = vld [vmem:[%s1 + $0xb4] sm:$0xf]
  %v101 = vld [vmem:[%s1 + $0xb8] sm:$0xf]
  %v102 = vld [vmem:[%s1 + $0xbc] sm:$0xf]
  %v103 = vld [vmem:[%s2] sm:$0x1]
  %v105 = vlaneseq
  %v106 = vshrl.u32 %v105, 7
  %v107 = vsub.s32 0, %v106
  %v108 = vrot.slane %v103, %v107
  %v142 = vunpack.c.l.b16 %v23
  %v143 = vunpack.c.h.b16 %v23
  %v144 = vunpack.c.l.b16 %v24
  %v145 = vunpack.c.l.b16 %v25
  %v146 = vunpack.c.h.b16 %v25
  %v147 = vunpack.c.l.b16 %v26
  %v148 = vunpack.c.l.b16 %v27
  %v149 = vunpack.c.h.b16 %v27
  %v150 = vunpack.c.l.b16 %v28
  %v151 = vunpack.c.l.b16 %v29
  %v152 = vunpack.c.h.b16 %v29
  %v153 = vunpack.c.l.b16 %v30
  %v154 = vunpack.c.l.b16 %v31
  %v155 = vunpack.c.h.b16 %v31
  %v156 = vunpack.c.l.b16 %v32
  %v157 = vunpack.c.l.b16 %v33
  %v158 = vunpack.c.h.b16 %v33
  %v159 = vunpack.c.l.b16 %v34
  %v160 = vunpack.c.l.b16 %v35
  %v161 = vunpack.c.h.b16 %v35
  %v162 = vunpack.c.l.b16 %v36
  %v163 = vunpack.c.l.b16 %v37
  %v164 = vunpack.c.h.b16 %v37
  %v165 = vunpack.c.l.b16 %v38
  %v166 = vunpack.c.l.b16 %v39
  %v167 = vunpack.c.h.b16 %v39
  %v168 = vunpack.c.l.b16 %v40
  %v169 = vunpack.c.l.b16 %v41
  %v170 = vunpack.c.h.b16 %v41
  %v171 = vunpack.c.l.b16 %v42
  %v172 = vunpack.c.l.b16 %v43
  %v173 = vunpack.c.h.b16 %v43
  %v174 = vunpack.c.l.b16 %v44
  %v175 = vunpack.c.l.b16 %v45
  %v176 = vunpack.c.h.b16 %v45
  %v177 = vunpack.c.l.b16 %v46
  %v178 = vunpack.c.l.b16 %v47
  %v179 = vunpack.c.h.b16 %v47
  %v180 = vunpack.c.l.b16 %v48
  %v181 = vunpack.c.l.b16 %v49
  %v182 = vunpack.c.h.b16 %v49
  %v183 = vunpack.c.l.b16 %v50
  %v184 = vunpack.c.l.b16 %v51
  %v185 = vunpack.c.h.b16 %v51
  %v186 = vunpack.c.l.b16 %v52
  %v187 = vunpack.c.l.b16 %v53
  %v188 = vunpack.c.h.b16 %v53
  %v189 = vunpack.c.l.b16 %v54
  %v190 = vpack.c.b16 %v145, %v142
  %v191 = vpack.c.b16 %v146, %v143
  %v192 = vpack.c.b16 %v147, %v144
  %v193 = vpack.c.b16 %v151, %v148
  %v194 = vpack.c.b16 %v152, %v149
  %v195 = vpack.c.b16 %v153, %v150
  %v196 = vpack.c.b16 %v157, %v154
  %v197 = vpack.c.b16 %v158, %v155
  %v198 = vpack.c.b16 %v159, %v156
  %v199 = vpack.c.b16 %v163, %v160
  %v200 = vpack.c.b16 %v164, %v161
  %v201 = vpack.c.b16 %v165, %v162
  %v202 = vpack.c.b16 %v169, %v166
  %v203 = vpack.c.b16 %v170, %v167
  %v204 = vpack.c.b16 %v171, %v168
  %v205 = vpack.c.b16 %v175, %v172
  %v206 = vpack.c.b16 %v176, %v173
  %v207 = vpack.c.b16 %v177, %v174
  %v208 = vpack.c.b16 %v181, %v178
  %v209 = vpack.c.b16 %v182, %v179
  %v210 = vpack.c.b16 %v183, %v180
  %v211 = vpack.c.b16 %v187, %v184
  %v212 = vpack.c.b16 %v188, %v185
  %v213 = vpack.c.b16 %v189, %v186
  %v286 = vunpack.c.l.b16 %v55
  %v287 = vunpack.c.l.b16 %v56
  %v288 = vunpack.c.l.b16 %v57
  %v289 = vunpack.c.l.b16 %v58
  %v290 = vunpack.c.l.b16 %v59
  %v291 = vunpack.c.l.b16 %v60
  %v292 = vunpack.c.l.b16 %v61
  %v293 = vunpack.c.l.b16 %v62
  %v294 = vunpack.c.l.b16 %v63
  %v295 = vunpack.c.l.b16 %v64
  %v296 = vunpack.c.l.b16 %v65
  %v297 = vunpack.c.l.b16 %v66
  %v298 = vunpack.c.l.b16 %v67
  %v299 = vunpack.c.l.b16 %v68
  %v300 = vunpack.c.l.b16 %v69
  %v301 = vunpack.c.l.b16 %v70
  %v302 = vunpack.c.l.b16 %v71
  %v303 = vunpack.c.l.b16 %v72
  %v304 = vunpack.c.l.b16 %v73
  %v305 = vunpack.c.l.b16 %v74
  %v306 = vunpack.c.l.b16 %v75
  %v307 = vunpack.c.l.b16 %v76
  %v308 = vunpack.c.l.b16 %v77
  %v309 = vunpack.c.l.b16 %v78
  %v310 = vunpack.c.l.b16 %v79
  %v311 = vunpack.c.l.b16 %v80
  %v312 = vunpack.c.l.b16 %v81
  %v313 = vunpack.c.l.b16 %v82
  %v314 = vunpack.c.l.b16 %v83
  %v315 = vunpack.c.l.b16 %v84
  %v316 = vunpack.c.l.b16 %v85
  %v317 = vunpack.c.l.b16 %v86
  %v318 = vunpack.c.l.b16 %v87
  %v319 = vunpack.c.l.b16 %v88
  %v320 = vunpack.c.l.b16 %v89
  %v321 = vunpack.c.l.b16 %v90
  %v322 = vunpack.c.l.b16 %v91
  %v323 = vunpack.c.l.b16 %v92
  %v324 = vunpack.c.l.b16 %v93
  %v325 = vunpack.c.l.b16 %v94
  %v326 = vunpack.c.l.b16 %v95
  %v327 = vunpack.c.l.b16 %v96
  %v328 = vunpack.c.l.b16 %v97
  %v329 = vunpack.c.l.b16 %v98
  %v330 = vunpack.c.l.b16 %v99
  %v331 = vunpack.c.l.b16 %v100
  %v332 = vunpack.c.l.b16 %v101
  %v333 = vunpack.c.l.b16 %v102
  %v334 = vpack.c.b16 %v287, %v286
  %v335 = vpack.c.b16 %v289, %v288
  %v336 = vpack.c.b16 %v291, %v290
  %v337 = vpack.c.b16 %v293, %v292
  %v338 = vpack.c.b16 %v295, %v294
  %v339 = vpack.c.b16 %v297, %v296
  %v340 = vpack.c.b16 %v299, %v298
  %v341 = vpack.c.b16 %v301, %v300
  %v342 = vpack.c.b16 %v303, %v302
  %v343 = vpack.c.b16 %v305, %v304
  %v344 = vpack.c.b16 %v307, %v306
  %v345 = vpack.c.b16 %v309, %v308
  %v346 = vpack.c.b16 %v311, %v310
  %v347 = vpack.c.b16 %v313, %v312
  %v348 = vpack.c.b16 %v315, %v314
  %v349 = vpack.c.b16 %v317, %v316
  %v350 = vpack.c.b16 %v319, %v318
  %v351 = vpack.c.b16 %v321, %v320
  %v352 = vpack.c.b16 %v323, %v322
  %v353 = vpack.c.b16 %v325, %v324
  %v354 = vpack.c.b16 %v327, %v326
  %v355 = vpack.c.b16 %v329, %v328
  %v356 = vpack.c.b16 %v331, %v330
  %v357 = vpack.c.b16 %v333, %v332
  %382 = vmatprep.subr.bf16.mxu0 0
  %383 = vmatpush1.bf16.msra.mxu0 %v341
  %384 = vmatprep.subr.bf16.mxu0 0
  %385 = vmatpush1.bf16.msra.mxu0 %v340
  %386 = vmatprep.subr.bf16.mxu0 0
  %387 = vmatpush1.bf16.msra.mxu0 %v339
  %388 = vmatprep.subr.bf16.mxu0 0
  %389 = vmatpush1.bf16.msra.mxu0 %v338
  %390 = vmatprep.subr.bf16.mxu0 0
  %391 = vmatpush1.bf16.msra.mxu0 %v337
  %392 = vmatprep.subr.bf16.mxu0 0
  %393 = vmatpush1.bf16.msra.mxu0 %v336
  %394 = vmatprep.subr.bf16.mxu0 0
  %395 = vmatpush1.bf16.msra.mxu0 %v335
  %396 = vmatprep.subr.bf16.mxu0 0
  %397 = vmatpush1.bf16.msra.mxu0 %v334
  %398 = vmatprep.subr.bf16.mxu0 0
  %399 = vmatpush2.bf16.msra.mxu0 %v349
  %400 = vmatprep.subr.bf16.mxu0 0
  %401 = vmatpush2.bf16.msra.mxu0 %v348
  %402 = vmatprep.subr.bf16.mxu0 0
  %403 = vmatpush2.bf16.msra.mxu0 %v347
  %404 = vmatprep.subr.bf16.mxu0 0
  %405 = vmatpush2.bf16.msra.mxu0 %v346
  %406 = vmatprep.subr.bf16.mxu0 0
  %407 = vmatpush2.bf16.msra.mxu0 %v345
  %408 = vmatprep.subr.bf16.mxu0 0
  %409 = vmatpush2.bf16.msra.mxu0 %v344
  %410 = vmatprep.subr.bf16.mxu0 0
  %411 = vmatpush2.bf16.msra.mxu0 %v343
  %412 = vmatprep.subr.bf16.mxu0 0
  %413 = vmatpush2.bf16.msra.mxu0 %v342
  %414 = vmatprep.mubr.bf16.mxu0 %v191
  %415 = vmatmul.mubr.bf16.gmra.mxu0 %v190
  %v416 = vpop.f32.mrf.mxu0
  %v417 = vadd.f32 %v108, %v416
  %v418 = vpop.f32.mrf.mxu0
  %v419 = vpop.f32.mrf.mxu0
  %v420 = vadd.f32 %v108, %v419
  %v421 = vpop.f32.mrf.mxu0
  %422 = vmatprep.mubr.bf16.mxu0 %v194
  %423 = vmatmul.mubr.bf16.gmra.mxu0 %v193
  %v424 = vpop.f32.mrf.mxu0
  %v425 = vadd.f32 %v108, %v424
  %v426 = vpop.f32.mrf.mxu0
  %v427 = vpop.f32.mrf.mxu0
  %v428 = vadd.f32 %v108, %v427
  %v429 = vpop.f32.mrf.mxu0
  %430 = vmatprep.mubr.bf16.mxu0 %v197
  %431 = vmatmul.mubr.bf16.gmra.mxu0 %v196
  %v432 = vpop.f32.mrf.mxu0
  %v433 = vadd.f32 %v108, %v432
  %v434 = vpop.f32.mrf.mxu0
  %v435 = vpop.f32.mrf.mxu0
  %v436 = vadd.f32 %v108, %v435
  %v437 = vpop.f32.mrf.mxu0
  %438 = vmatprep.mubr.bf16.mxu0 %v200
  %439 = vmatmul.mubr.bf16.gmra.mxu0 %v199
  %v440 = vpop.f32.mrf.mxu0
  %v441 = vadd.f32 %v108, %v440
  %v442 = vpop.f32.mrf.mxu0
  %v443 = vpop.f32.mrf.mxu0
  %v444 = vadd.f32 %v108, %v443
  %v445 = vpop.f32.mrf.mxu0
  %446 = vmatprep.mubr.bf16.mxu0 %v203
  %447 = vmatmul.mubr.bf16.gmra.mxu0 %v202
  %v448 = vpop.f32.mrf.mxu0
  %v449 = vadd.f32 %v108, %v448
  %v450 = vpop.f32.mrf.mxu0
  %v451 = vpop.f32.mrf.mxu0
  %v452 = vadd.f32 %v108, %v451
  %v453 = vpop.f32.mrf.mxu0
  %454 = vmatprep.mubr.bf16.mxu0 %v206
  %455 = vmatmul.mubr.bf16.gmra.mxu0 %v205
  %v456 = vpop.f32.mrf.mxu0
  %v457 = vadd.f32 %v108, %v456
  %v458 = vpop.f32.mrf.mxu0
  %v459 = vpop.f32.mrf.mxu0
  %v460 = vadd.f32 %v108, %v459
  %v461 = vpop.f32.mrf.mxu0
  %462 = vmatprep.mubr.bf16.mxu0 %v209
  %463 = vmatmul.mubr.bf16.gmra.mxu0 %v208
  %v464 = vpop.f32.mrf.mxu0
  %v465 = vadd.f32 %v108, %v464
  %v466 = vpop.f32.mrf.mxu0
  %v467 = vpop.f32.mrf.mxu0
  %v468 = vadd.f32 %v108, %v467
  %v469 = vpop.f32.mrf.mxu0
  %470 = vmatprep.mubr.bf16.mxu0 %v212
  %471 = vmatmul.mubr.bf16.gmra.mxu0 %v211
  %v472 = vpop.f32.mrf.mxu0
  %v473 = vadd.f32 %v108, %v472
  %v474 = vpop.f32.mrf.mxu0
  %v475 = vpop.f32.mrf.mxu0
  %v476 = vadd.f32 %v108, %v475
  %v477 = vpop.f32.mrf.mxu0
  %478 = vdwg.mxu0
  %479 = vmatprep.subr.bf16.mxu0 0
  %480 = vmatpush1.bf16.msra.mxu0 %v357
  %481 = vmatprep.subr.bf16.mxu0 0
  %482 = vmatpush1.bf16.msra.mxu0 %v356
  %483 = vmatprep.subr.bf16.mxu0 0
  %484 = vmatpush1.bf16.msra.mxu0 %v355
  %485 = vmatprep.subr.bf16.mxu0 0
  %486 = vmatpush1.bf16.msra.mxu0 %v354
  %487 = vmatprep.subr.bf16.mxu0 0
  %488 = vmatpush1.bf16.msra.mxu0 %v353
  %489 = vmatprep.subr.bf16.mxu0 0
  %490 = vmatpush1.bf16.msra.mxu0 %v352
  %491 = vmatprep.subr.bf16.mxu0 0
  %492 = vmatpush1.bf16.msra.mxu0 %v351
  %493 = vmatprep.subr.bf16.mxu0 0
  %494 = vmatpush1.bf16.msra.mxu0 %v350
  %495 = vmatprep.subr.bf16.mxu0 0
  %496 = vmatpush2.bf16.msra.mxu0 0
  %497 = vmatprep.subr.bf16.mxu0 0
  %498 = vmatpush2.bf16.msra.mxu0 0
  %499 = vmatprep.subr.bf16.mxu0 0
  %500 = vmatpush2.bf16.msra.mxu0 0
  %501 = vmatprep.subr.bf16.mxu0 0
  %502 = vmatpush2.bf16.msra.mxu0 0
  %503 = vmatprep.subr.bf16.mxu0 0
  %504 = vmatpush2.bf16.msra.mxu0 0
  %505 = vmatprep.subr.bf16.mxu0 0
  %506 = vmatpush2.bf16.msra.mxu0 0
  %507 = vmatprep.subr.bf16.mxu0 0
  %508 = vmatpush2.bf16.msra.mxu0 0
  %509 = vmatprep.subr.bf16.mxu0 0
  %510 = vmatpush2.bf16.msra.mxu0 0
  %511 = vmatprep.mubr.bf16.mxu0 0
  %512 = vmatmul.mubr.bf16.gmra.mxu0 %v192
  %v513 = vpop.f32.mrf.mxu0
  %v514 = vadd.f32 %v417, %v513
  %v515 = vpop.f32.mrf.mxu0
  %v516 = vpop.f32.mrf.mxu0
  %v517 = vadd.f32 %v420, %v516
  %v518 = vpop.f32.mrf.mxu0
  %519 = vmatprep.mubr.bf16.mxu0 0
  %520 = vmatmul.mubr.bf16.gmra.mxu0 %v195
  %v521 = vpop.f32.mrf.mxu0
  %v522 = vadd.f32 %v425, %v521
  %v523 = vpop.f32.mrf.mxu0
  %v524 = vpop.f32.mrf.mxu0
  %v525 = vadd.f32 %v428, %v524
  %v526 = vpop.f32.mrf.mxu0
  %527 = vmatprep.mubr.bf16.mxu0 0
  %528 = vmatmul.mubr.bf16.gmra.mxu0 %v198
  %v529 = vpop.f32.mrf.mxu0
  %v530 = vadd.f32 %v433, %v529
  %v531 = vpop.f32.mrf.mxu0
  %v532 = vpop.f32.mrf.mxu0
  %v533 = vadd.f32 %v436, %v532
  %v534 = vpop.f32.mrf.mxu0
  %535 = vmatprep.mubr.bf16.mxu0 0
  %536 = vmatmul.mubr.bf16.gmra.mxu0 %v201
  %v537 = vpop.f32.mrf.mxu0
  %v538 = vadd.f32 %v441, %v537
  %v539 = vpop.f32.mrf.mxu0
  %v540 = vpop.f32.mrf.mxu0
  %v541 = vadd.f32 %v444, %v540
  %v542 = vpop.f32.mrf.mxu0
  %543 = vmatprep.mubr.bf16.mxu0 0
  %544 = vmatmul.mubr.bf16.gmra.mxu0 %v204
  %v545 = vpop.f32.mrf.mxu0
  %v546 = vadd.f32 %v449, %v545
  %v547 = vpop.f32.mrf.mxu0
  %v548 = vpop.f32.mrf.mxu0
  %v549 = vadd.f32 %v452, %v548
  %v550 = vpop.f32.mrf.mxu0
  %551 = vmatprep.mubr.bf16.mxu0 0
  %552 = vmatmul.mubr.bf16.gmra.mxu0 %v207
  %v553 = vpop.f32.mrf.mxu0
  %v554 = vadd.f32 %v457, %v553
  %v555 = vpop.f32.mrf.mxu0
  %v556 = vpop.f32.mrf.mxu0
  %v557 = vadd.f32 %v460, %v556
  %v558 = vpop.f32.mrf.mxu0
  %559 = vmatprep.mubr.bf16.mxu0 0
  %560 = vmatmul.mubr.bf16.gmra.mxu0 %v210
  %v561 = vpop.f32.mrf.mxu0
  %v562 = vadd.f32 %v465, %v561
  %v563 = vpop.f32.mrf.mxu0
  %v564 = vpop.f32.mrf.mxu0
  %v565 = vadd.f32 %v468, %v564
  %v566 = vpop.f32.mrf.mxu0
  %567 = vmatprep.mubr.bf16.mxu0 0
  %568 = vmatmul.mubr.bf16.gmra.mxu0 %v213
  %v569 = vpop.f32.mrf.mxu0
  %v570 = vadd.f32 %v473, %v569
  %v571 = vpop.f32.mrf.mxu0
  %v572 = vpop.f32.mrf.mxu0
  %v573 = vadd.f32 %v476, %v572
  %v574 = vpop.f32.mrf.mxu0
  %575 = vdwg.mxu0
  %vm576 = vcmp.ge.f32.partialorder %v514, 0.0
  %vm577 = vcmp.ge.f32.partialorder %v517, 0.0
  %vm578 = vcmp.ge.f32.partialorder %v522, 0.0
  %vm579 = vcmp.ge.f32.partialorder %v525, 0.0
  %vm580 = vcmp.ge.f32.partialorder %v530, 0.0
  %vm581 = vcmp.ge.f32.partialorder %v533, 0.0
  %vm582 = vcmp.ge.f32.partialorder %v538, 0.0
  %vm583 = vcmp.ge.f32.partialorder %v541, 0.0
  %vm584 = vcmp.ge.f32.partialorder %v546, 0.0
  %vm585 = vcmp.ge.f32.partialorder %v549, 0.0
  %vm586 = vcmp.ge.f32.partialorder %v554, 0.0
  %vm587 = vcmp.ge.f32.partialorder %v557, 0.0
  %vm588 = vcmp.ge.f32.partialorder %v562, 0.0
  %vm589 = vcmp.ge.f32.partialorder %v565, 0.0
  %vm590 = vcmp.ge.f32.partialorder %v570, 0.0
  %vm591 = vcmp.ge.f32.partialorder %v573, 0.0
  %v592 = vmul.f32 %v514, 0.2
  %v593 = vmul.f32 %v517, 0.2
  %v594 = vmul.f32 %v522, 0.2
  %v595 = vmul.f32 %v525, 0.2
  %v596 = vmul.f32 %v530, 0.2
  %v597 = vmul.f32 %v533, 0.2
  %v598 = vmul.f32 %v538, 0.2
  %v599 = vmul.f32 %v541, 0.2
  %v600 = vmul.f32 %v546, 0.2
  %v601 = vmul.f32 %v549, 0.2
  %v602 = vmul.f32 %v554, 0.2
  %v603 = vmul.f32 %v557, 0.2
  %v604 = vmul.f32 %v562, 0.2
  %v605 = vmul.f32 %v565, 0.2
  %v606 = vmul.f32 %v570, 0.2
  %v607 = vmul.f32 %v573, 0.2
  %v608 = vsel %vm576, %v514, %v592
  %v609 = vsel %vm577, %v517, %v593
  %v610 = vsel %vm578, %v522, %v594
  %v611 = vsel %vm579, %v525, %v595
  %v612 = vsel %vm580, %v530, %v596
  %v613 = vsel %vm581, %v533, %v597
  %v614 = vsel %vm582, %v538, %v598
  %v615 = vsel %vm583, %v541, %v599
  %v616 = vsel %vm584, %v546, %v600
  %v617 = vsel %vm585, %v549, %v601
  %v618 = vsel %vm586, %v554, %v602
  %v619 = vsel %vm587, %v557, %v603
  %v620 = vsel %vm588, %v562, %v604
  %v621 = vsel %vm589, %v565, %v605
  %v622 = vsel %vm590, %v570, %v606
  %v623 = vsel %vm591, %v573, %v607
  %624 = vst [vmem:[#allocation2] sm:$0xff] %v608
  %625 = vst [vmem:[#allocation2 + $0x8] sm:$0xff] %v609
  %626 = vst [vmem:[#allocation2 + $0x10] sm:$0xff] %v610
  %627 = vst [vmem:[#allocation2 + $0x18] sm:$0xff] %v611
  %628 = vst [vmem:[#allocation2 + $0x20] sm:$0xff] %v612
  %629 = vst [vmem:[#allocation2 + $0x28] sm:$0xff] %v613
  %630 = vst [vmem:[#allocation2 + $0x30] sm:$0xff] %v614
  %631 = vst [vmem:[#allocation2 + $0x38] sm:$0xff] %v615
  %632 = vst [vmem:[#allocation2 + $0x40] sm:$0xff] %v616
  %633 = vst [vmem:[#allocation2 + $0x48] sm:$0xff] %v617
  %634 = vst [vmem:[#allocation2 + $0x50] sm:$0xff] %v618
  %635 = vst [vmem:[#allocation2 + $0x58] sm:$0xff] %v619
  %636 = vst [vmem:[#allocation2 + $0x60] sm:$0xff] %v620
  %637 = vst [vmem:[#allocation2 + $0x68] sm:$0xff] %v621
  %638 = vst [vmem:[#allocation2 + $0x70] sm:$0xff] %v622
  %639 = vst [vmem:[#allocation2 + $0x78] sm:$0xff] %v623
  %v640 = vld [vmem:[#allocation2] sm:$0xff]
  %v641 = vld [vmem:[%s3] sm:$0x1]
  %v642 = vlaneseq
  %v643 = vshrl.u32 %v642, 7
  %v644 = vsub.s32 0, %v643
  %v645 = vrot.slane %v641, %v644
  %v646 = vmul.f32 %v640, %v645
  %647 = vadd.xlane.f32.xlu0 %v646
  %v648 = vpop.xlane.xlu0 %647
  %v649 = vld [vmem:[#allocation2 + $0x8] sm:$0xff]
  %v650 = vld [vmem:[%s3 + $0x1] sm:$0x1]
  %v651 = vlaneseq
  %v652 = vshrl.u32 %v651, 7
  %v653 = vsub.s32 0, %v652
  %v654 = vrot.slane %v650, %v653
  %v655 = vmul.f32 %v649, %v654
  %656 = vadd.xlane.f32.xlu0 %v655
  %v657 = vpop.xlane.xlu0 %656
  %v658 = vadd.f32 %v648, %v657
  %v659 = vld [vmem:[#allocation2 + $0x10] sm:$0xff]
  %v660 = vld [vmem:[%s3 + $0x2] sm:$0x1]
  %v661 = vlaneseq
  %v662 = vshrl.u32 %v661, 7
  %v663 = vsub.s32 0, %v662
  %v664 = vrot.slane %v660, %v663
  %v665 = vmul.f32 %v659, %v664
  %666 = vadd.xlane.f32.xlu0 %v665
  %v667 = vpop.xlane.xlu0 %666
  %v668 = vadd.f32 %v658, %v667
  %v669 = vld [vmem:[#allocation2 + $0x18] sm:$0xff]
  %v670 = vld [vmem:[%s3 + $0x3] sm:$0x1]
  %v671 = vlaneseq
  %v672 = vshrl.u32 %v671, 7
  %v673 = vsub.s32 0, %v672
  %v674 = vrot.slane %v670, %v673
  %v675 = vmul.f32 %v669, %v674
  %676 = vadd.xlane.f32.xlu0 %v675
  %v677 = vpop.xlane.xlu0 %676
  %v678 = vadd.f32 %v668, %v677
  %v679 = vld [vmem:[#allocation2 + $0x20] sm:$0xff]
  %v680 = vld [vmem:[%s3 + $0x4] sm:$0x1]
  %v681 = vlaneseq
  %v682 = vshrl.u32 %v681, 7
  %v683 = vsub.s32 0, %v682
  %v684 = vrot.slane %v680, %v683
  %v685 = vmul.f32 %v679, %v684
  %686 = vadd.xlane.f32.xlu0 %v685
  %v687 = vpop.xlane.xlu0 %686
  %v688 = vadd.f32 %v678, %v687
  %v689 = vld [vmem:[#allocation2 + $0x28] sm:$0xff]
  %v690 = vld [vmem:[%s3 + $0x5] sm:$0x1]
  %v691 = vlaneseq
  %v692 = vshrl.u32 %v691, 7
  %v693 = vsub.s32 0, %v692
  %v694 = vrot.slane %v690, %v693
  %v695 = vmul.f32 %v689, %v694
  %696 = vadd.xlane.f32.xlu0 %v695
  %v697 = vpop.xlane.xlu0 %696
  %v698 = vadd.f32 %v688, %v697
  %v699 = vld [vmem:[#allocation2 + $0x30] sm:$0xff]
  %v700 = vld [vmem:[%s3 + $0x6] sm:$0x1]
  %v701 = vlaneseq
  %v702 = vshrl.u32 %v701, 7
  %v703 = vsub.s32 0, %v702
  %v704 = vrot.slane %v700, %v703
  %v705 = vmul.f32 %v699, %v704
  %706 = vadd.xlane.f32.xlu0 %v705
  %v707 = vpop.xlane.xlu0 %706
  %v708 = vadd.f32 %v698, %v707
  %v709 = vld [vmem:[#allocation2 + $0x38] sm:$0xff]
  %v710 = vld [vmem:[%s3 + $0x7] sm:$0x1]
  %v711 = vlaneseq
  %v712 = vshrl.u32 %v711, 7
  %v713 = vsub.s32 0, %v712
  %v714 = vrot.slane %v710, %v713
  %v715 = vmul.f32 %v709, %v714
  %716 = vadd.xlane.f32.xlu0 %v715
  %v717 = vpop.xlane.xlu0 %716
  %v718 = vadd.f32 %v708, %v717
  %v719 = vld [vmem:[#allocation2 + $0x40] sm:$0xff]
  %v720 = vld [vmem:[%s3 + $0x8] sm:$0x1]
  %v721 = vlaneseq
  %v722 = vshrl.u32 %v721, 7
  %v723 = vsub.s32 0, %v722
  %v724 = vrot.slane %v720, %v723
  %v725 = vmul.f32 %v719, %v724
  %726 = vadd.xlane.f32.xlu0 %v725
  %v727 = vpop.xlane.xlu0 %726
  %v728 = vadd.f32 %v718, %v727
  %v729 = vld [vmem:[#allocation2 + $0x48] sm:$0xff]
  %v730 = vld [vmem:[%s3 + $0x9] sm:$0x1]
  %v731 = vlaneseq
  %v732 = vshrl.u32 %v731, 7
  %v733 = vsub.s32 0, %v732
  %v734 = vrot.slane %v730, %v733
  %v735 = vmul.f32 %v729, %v734
  %736 = vadd.xlane.f32.xlu0 %v735
  %v737 = vpop.xlane.xlu0 %736
  %v738 = vadd.f32 %v728, %v737
  %v739 = vld [vmem:[#allocation2 + $0x50] sm:$0xff]
  %v740 = vld [vmem:[%s3 + $0xa] sm:$0x1]
  %v741 = vlaneseq
  %v742 = vshrl.u32 %v741, 7
  %v743 = vsub.s32 0, %v742
  %v744 = vrot.slane %v740, %v743
  %v745 = vmul.f32 %v739, %v744
  %746 = vadd.xlane.f32.xlu0 %v745
  %v747 = vpop.xlane.xlu0 %746
  %v748 = vadd.f32 %v738, %v747
  %v749 = vld [vmem:[#allocation2 + $0x58] sm:$0xff]
  %v750 = vld [vmem:[%s3 + $0xb] sm:$0x1]
  %v751 = vlaneseq
  %v752 = vshrl.u32 %v751, 7
  %v753 = vsub.s32 0, %v752
  %v754 = vrot.slane %v750, %v753
  %v755 = vmul.f32 %v749, %v754
  %756 = vadd.xlane.f32.xlu0 %v755
  %v757 = vpop.xlane.xlu0 %756
  %v758 = vadd.f32 %v748, %v757
  %v759 = vld [vmem:[#allocation2 + $0x60] sm:$0xff]
  %v760 = vld [vmem:[%s3 + $0xc] sm:$0x1]
  %v761 = vlaneseq
  %v762 = vshrl.u32 %v761, 7
  %v763 = vsub.s32 0, %v762
  %v764 = vrot.slane %v760, %v763
  %v765 = vmul.f32 %v759, %v764
  %766 = vadd.xlane.f32.xlu0 %v765
  %v767 = vpop.xlane.xlu0 %766
  %v768 = vadd.f32 %v758, %v767
  %v769 = vld [vmem:[#allocation2 + $0x68] sm:$0xff]
  %v770 = vld [vmem:[%s3 + $0xd] sm:$0x1]
  %v771 = vlaneseq
  %v772 = vshrl.u32 %v771, 7
  %v773 = vsub.s32 0, %v772
  %v774 = vrot.slane %v770, %v773
  %v775 = vmul.f32 %v769, %v774
  %776 = vadd.xlane.f32.xlu0 %v775
  %v777 = vpop.xlane.xlu0 %776
  %v778 = vadd.f32 %v768, %v777
  %v779 = vld [vmem:[#allocation2 + $0x70] sm:$0xff]
  %v780 = vld [vmem:[%s3 + $0xe] sm:$0x1]
  %v781 = vlaneseq
  %v782 = vshrl.u32 %v781, 7
  %v783 = vsub.s32 0, %v782
  %v784 = vrot.slane %v780, %v783
  %v785 = vmul.f32 %v779, %v784
  %786 = vadd.xlane.f32.xlu0 %v785
  %v787 = vpop.xlane.xlu0 %786
  %v788 = vadd.f32 %v778, %v787
  %v789 = vld [vmem:[#allocation2 + $0x78] sm:$0xff]
  %v790 = vld [vmem:[%s3 + $0xf] sm:$0x1]
  %v791 = vlaneseq
  %v792 = vshrl.u32 %v791, 7
  %v793 = vsub.s32 0, %v792
  %v794 = vrot.slane %v790, %v793
  %v795 = vmul.f32 %v789, %v794
  %796 = vadd.xlane.f32.xlu0 %v795
  %v797 = vpop.xlane.xlu0 %796
  %v798 = vadd.f32 %v788, %v797
  %v799 = vld [vmem:[#allocation3] sm:$0x1]
  %v801 = vlaneseq
  %v802 = vshrl.u32 %v801, 7
  %v803 = vsub.s32 0, %v802
  %v804 = vrot.slane %v799, %v803
  %v806 = vadd.f32 %v798, %v804
  %v807 = vsub.f32 0.0, %v806
  %v808 = vmul.f32 %v807, 1.442695
  %v809 = vpow.pop %v808
  %v810 = vadd.f32 %v809, 1.0
  %v811 = vrcp.pop %v810
  %813 = vset.pattern.permute.xlu0 0
  %814 = vperm.xlu0 %813, %v811
  %v815 = vpop.permute.xlu0 %814
  %817 = vst [vmem:[%s5] sm:$0xff] %v815
  // Predicated region
  $region22: #{_cond_forward.1} parent=0 // pred_check
    _
  $region23: #{_cond_forward.1} parent=0 // pred_check_branch
    %819 = sbr.rel (0) target = $region25
  $region24: #{_cond_forward.1} parent=0 // pred_region
    _
  $region25: #{_cond_forward.1} parent=0 // pred_fallthru
    _
  // Predicated region
  $region26: #{_cond_forward.1} parent=0 // pred_check
    _
  $region27: #{_cond_forward.1} parent=0 // pred_check_branch
    %821 = sbr.rel (0) target = $region29
  $region28: #{_cond_forward.1} parent=0 // pred_region
    _
  $region29: #{_cond_forward.1} parent=0 // pred_fallthru
    _

</llo_original>
